<compile_context>
chip_gen: v7x
topology: tpu7x:2x2x1
jax: 0.10.0
libtpu: 0.0.40
codegen_flags: <defaults>
</compile_context>

<pallas_src>
import math

import jax
import jax.numpy as jnp
from jax.experimental import pallas as pl
from jax.experimental.pallas import tpu as pltpu


def _round_up(x, m):
    return (x + m - 1) // m * m


def _pos_encoding_kernel(t_ref, x_ref, pe_ref, out_ref):
    # t_ref   : (TM, 1)      int32 time indices for this row tile (VMEM)
    # x_ref   : (TM, D)      input rows (VMEM)
    # pe_ref  : (max_len, D) full positional-encoding table (VMEM, grid-invariant)
    # out_ref : (TM, D)
    tm = t_ref.shape[0]
    max_len = pe_ref.shape[0]

    t = t_ref[...]                                                  # (TM, 1) int32
    col = jax.lax.broadcasted_iota(jnp.int32, (tm, max_len), 1)     # (TM, max_len)
    onehot = (col == t).astype(x_ref.dtype)                         # (TM, max_len)

    # Row gather as a one-hot matmul on the MXU (free compute; avoids per-row
    # dynamic slices / scalar-driven gather).  HIGHEST precision keeps the f32
    # table values exact through the MXU passes.
    rows = jnp.dot(
        onehot,
        pe_ref[...],
        preferred_element_type=jnp.float32,
        precision=jax.lax.Precision.HIGHEST,
    )                                                               # (TM, D) f32

    out_ref[...] = (x_ref[...] + rows).astype(out_ref.dtype)


def make_pe_table(n_filters, max_len, dtype=jnp.float32):
    """Same table as the PyTorch __init__: interleaved sin/cos."""
    position = jnp.arange(max_len, dtype=jnp.float32)[:, None]          # (max_len, 1)
    div_term = jnp.exp(
        jnp.arange(0, n_filters, 2, dtype=jnp.float32)
        * (-(math.log(10000.0) / n_filters))
    )                                                                    # (n_filters//2,)
    ang = position * div_term                                            # (max_len, n_filters//2)
    # pe[:, 0::2] = sin, pe[:, 1::2] = cos  <=>  interleave on the last axis
    pe = jnp.stack([jnp.sin(ang), jnp.cos(ang)], axis=-1).reshape(max_len, n_filters)
    return pe.astype(dtype)


def position_encoding(x, times, pe, *, block_rows=None):
    """x: (B, L, D) float32, times: (B, L) integer indices, pe: (max_len, D)."""
    B, L, D = x.shape
    max_len, d_pe = pe.shape
    assert d_pe == D

    # Flatten batch*seq into one row axis -> a few big lane-dense tiles.
    M = B * L
    x2 = x.reshape(M, D)
    t2 = times.reshape(M, 1).astype(jnp.int32)

    if block_rows is None:
        # Large tiles (amortize the ~0.35us/step pipeline overhead), but at
        # least 2 tiles when M allows so the 'parallel' grid axis can shard
        # across both TensorCores on v7x.  Multiple of 8 sublanes.
        block_rows = min(512, max(8, _round_up(pl.cdiv(M, 2), 8)))

    Mp = _round_up(M, block_rows)
    if Mp != M:
        x2 = jnp.pad(x2, ((0, Mp - M), (0, 0)))
        t2 = jnp.pad(t2, ((0, Mp - M), (0, 0)))
    n_tiles = Mp // block_rows

    out = pl.pallas_call(
        _pos_encoding_kernel,
        out_shape=jax.ShapeDtypeStruct((Mp, D), x.dtype),
        grid=(n_tiles,),
        in_specs=[
            pl.BlockSpec((block_rows, 1), lambda i: (i, 0)),   # times column
            pl.BlockSpec((block_rows, D), lambda i: (i, 0)),   # x rows
            # Full pe table, grid-invariant.
            # TODO(synk): for production-size tables on v7x (64 MiB VMEM),
            # single-buffer this spec (pipeline_mode=pl.Buffered(1)) or keep
            # the table in bf16; at demo sizes double-buffering is negligible.
            pl.BlockSpec((max_len, D), lambda i: (0, 0)),
        ],
        out_specs=pl.BlockSpec((block_rows, D), lambda i: (i, 0)),
        compiler_params=pltpu.CompilerParams(
            dimension_semantics=("parallel",),
            vmem_limit_bytes=32 * 1024 * 1024,
        ),
    )(t2, x2, pe)

    if Mp != M:
        out = out[:M]
    return out.reshape(B, L, D)


if __name__ == "__main__":
    # Small shapes consistent with the module config:
    # hidden D = f_out = 128, table length = max_node_num = 96.
    B, L, D, MAX_LEN = 2, 8, 128, 96

    key = jax.random.PRNGKey(0)
    kx, kt = jax.random.split(key)
    x = jax.random.normal(kx, (B, L, D), dtype=jnp.float32)
    times = jax.random.randint(kt, (B, L), 0, MAX_LEN, dtype=jnp.int32)

    pe = make_pe_table(n_filters=D, max_len=MAX_LEN)   # deterministic "buffer"

    out = position_encoding(x, times, pe)
    out = jax.block_until_ready(out)

    # Pure-JAX reference (same semantics as the PyTorch forward).
    ref = x + pe[times]
    assert out.shape == x.shape and out.dtype == x.dtype
    assert jnp.allclose(out, ref, atol=1e-5, rtol=1e-5), "mismatch vs reference"

    print("KERNEL_OK")
</pallas_src>

<mosaic_0001>
module attributes {stable_mosaic.version = 11 : i64} {
  func.func @_pos_encoding_kernel(%arg0: i32, %arg1: memref<8x1xi32, #tpu.memory_space<vmem>>, %arg2: memref<8x128xf32, #tpu.memory_space<vmem>>, %arg3: memref<96x128xf32, #tpu.memory_space<vmem>>, %arg4: memref<8x128xf32, #tpu.memory_space<vmem>>) attributes {dimension_semantics = [#tpu.dimension_semantics<parallel>], iteration_bounds = array<i64: 2>, scalar_prefetch = 0 : i64, scratch_operands = 0 : i64, tpu.core_type = #tpu.core_type<tc>, window_params = [{transform_indices = @transform_0, window_bounds = array<i64: 8, 1>}, {transform_indices = @transform_1, window_bounds = array<i64: 8, 128>}, {pipeline_mode = #tpu.pipeline_mode<synchronous>, transform_indices = @transform_2, window_bounds = array<i64: 96, 128>}, {transform_indices = @transform_3, window_bounds = array<i64: 8, 128>}]} {
    %c0 = arith.constant 0 : index
    %c0_0 = arith.constant 0 : index
    %0 = vector.load %arg1[%c0, %c0_0] : memref<8x1xi32, #tpu.memory_space<vmem>>, vector<8x1xi32>
    %1 = tpu.iota {dimensions = array<i32: 1>} : vector<8x96xi32>
    %2 = vector.broadcast %0 : vector<8x1xi32> to vector<8x96xi32>
    %3 = arith.cmpi eq, %1, %2 : vector<8x96xi32>
    %4 = arith.extui %3 : vector<8x96xi1> to vector<8x96xi32>
    %5 = arith.sitofp %4 : vector<8x96xi32> to vector<8x96xf32>
    %c0_1 = arith.constant 0 : index
    %c0_2 = arith.constant 0 : index
    %6 = vector.load %arg3[%c0_1, %c0_2] : memref<96x128xf32, #tpu.memory_space<vmem>>, vector<96x128xf32>
    %cst = arith.constant dense<0.000000e+00> : vector<8x128xf32>
    %7 = tpu.matmul %5, %6, %cst {dimension_numbers = #tpu.dot_dimension_numbers<[1], [0], [0], [1], [0, 0, 1, 1], [], []>, precision = #tpu.contract_precision<fp32>} : vector<8x96xf32>, vector<96x128xf32>, vector<8x128xf32> -> vector<8x128xf32>
    %c0_3 = arith.constant 0 : index
    %c0_4 = arith.constant 0 : index
    %8 = vector.load %arg2[%c0_3, %c0_4] : memref<8x128xf32, #tpu.memory_space<vmem>>, vector<8x128xf32>
    %9 = arith.addf %8, %7 : vector<8x128xf32>
    %c0_5 = arith.constant 0 : index
    %c0_6 = arith.constant 0 : index
    %10 = vector.load %arg4[%c0_5, %c0_6] : memref<8x128xf32, #tpu.memory_space<vmem>>, vector<8x128xf32>
    tpu.vector_store %arg4[%c0_5, %c0_6], %9 {strides = array<i32>} : memref<8x128xf32, #tpu.memory_space<vmem>>, vector<8x128xf32>,
    return
  }
  func.func @transform_0(%arg0: i32) -> (i32, i32) {
    %c0_i32 = arith.constant 0 : i32
    %c0_i32_0 = arith.constant 0 : i32
    return %arg0, %c0_i32 : i32, i32
  }
  func.func @transform_1(%arg0: i32) -> (i32, i32) {
    %c0_i32 = arith.constant 0 : i32
    %c0_i32_0 = arith.constant 0 : i32
    return %arg0, %c0_i32 : i32, i32
  }
  func.func @transform_2(%arg0: i32) -> (i32, i32) {
    %c0_i32 = arith.constant 0 : i32
    %c0_i32_0 = arith.constant 0 : i32
    %c0_i32_1 = arith.constant 0 : i32
    return %c0_i32, %c0_i32_0 : i32, i32
  }
  func.func @transform_3(%arg0: i32) -> (i32, i32) {
    %c0_i32 = arith.constant 0 : i32
    %c0_i32_0 = arith.constant 0 : i32
    return %arg0, %c0_i32 : i32, i32
  }
}

</mosaic_0001>

<llo_original>
// kernel: tpu_custom_call.1
$region0: #{tpu_custom_call.1}
  #allocation0 [shape = 'u32[]', space=smem, size = 0x4, offset = 0x4, fixed_abs, tag = 'smem constant byte address 0x4 - core index']
  #allocation1 [shape = 'u32[144,128]{1,0:T(1,128)}', space=vmem, size = 0x12000, scoped, tag = 'internal scratch']
  %s0 = inlined_call_operand.vmem [shape: s32[16,1], index: 0, kind: input, shape index: {}]
  %s1 = inlined_call_operand.vmem [shape: f32[16,128], index: 1, kind: input, shape index: {}]
  %s2 = inlined_call_operand.hbm [shape: f32[96,128], index: 2, kind: input, shape index: {}]
  %s3 = inlined_call_operand.hbm [shape: f32[16,128], index: 3, kind: output, shape index: {}]
  %s4 = sld [smem:[#allocation0]]
  $region49: #{tpu_custom_call.1} parent=0
    _
  %s6 = ssub.s32 1, %s4
  %s7 = scalar_select 0, %s6, %s4
  $region1: #{tpu_custom_call.1} parent=0
    #allocation2 [shape = 'u8[49152]{0}', space=vmem, size = 0xc000, scoped, tag = 'input window, operand 2, single buffered']
    #allocation3 [shape = 's32[2]{0}', space=sflag, size = 0x8, scoped, tag = 'scoped memory for tpu_custom_call.1']
    #allocation4 [shape = 's32[2]{0}', space=sflag, size = 0x8, scoped, tag = 'scoped memory for tpu_custom_call.1']
    #allocation5 [shape = 'u8[8192]{0}', space=vmem, size = 0x2000, scoped, tag = 'output window, operand 0']
    %8 = vsyncpa [#allocation3], 0
    %9 = vsyncpa [#allocation4], 0
    %s10 = scalar_lea.sflag [#allocation4], 1
    %11 = vsyncpa %s10, 0
    loop: start=0, step=1, limit=4
    $region2: #{tpu_custom_call.1} parent=1 // loop_pre_header
      _
    $region3: #{tpu_custom_call.1} parent=1 // loop_header
      %s13 = sphi 0, %s17
      %p14 = scmp.ge.s32.totalorder %s13, 4
      %s23 = sphi 0, %s25
      %s26 = sphi 0, %s23
      %s27 = sphi 0, %s26
      %s43 = sphi 0, %s27
      %s49 = sphi 0, %s51
      %s52 = sphi 0, %s49
      %s53 = sphi 0, %s52
      %s69 = sphi 0, %s53
      %s73 = sphi 0, %s73
      %s75 = sphi 0, %s73
      %s76 = sphi 0, %s75
      %s90 = sphi 0, %s76
      %s96 = sphi 0, %s98
      %s99 = sphi 0, %s96
      %s100 = sphi 0, %s99
      %s116 = sphi 0, %s100
    $region4: #{tpu_custom_call.1} parent=1 // loop_header_branch
      %16 = sbr.rel (%p14) target = $region8
    $region5: #{tpu_custom_call.1} parent=1 // loop_body
      %s18 = ssub.s32 %s13, 1
      %s19 = ssub.s32 %s13, 2
      %s20 = sadd.s32 %s13, 1
      %s21 = ssub.s32 %s13, %s20
      %p22 = scmp.eq.s32.totalorder %s21, 0
      %s24 = sadd.s32 %s23, 1
      %s25 = scalar_select %p22, %s23, %s24
      %p28 = pneg %p22
      %p29 = scmp.eq.s32.totalorder %s13, 1
      %p30 = por %p28, %p29
      %p31 = scmp.ne.s32.totalorder %s23, %s26
      %p32 = scmp.eq.s32.totalorder %s13, 0
      %p33 = por %p31, %p32
      %p34 = scmp.ne.s32.totalorder %s23, %s26
      %p35 = scmp.eq.s32.totalorder %s18, 1
      %p36 = por %p34, %p35
      %p37 = scmp.ne.s32.totalorder %s26, %s27
      %p38 = scmp.eq.s32.totalorder %s18, 0
      %p39 = por %p37, %p38
      %p40 = scmp.ne.s32.totalorder %s26, %s27
      %p41 = scmp.eq.s32.totalorder %s19, 1
      %p42 = por %p40, %p41
      %p44 = scmp.ne.s32.totalorder %s27, %s43
      %p45 = scmp.eq.s32.totalorder %s19, 0
      %p46 = por %p44, %p45
      %s47 = ssub.s32 %s13, %s20
      %p48 = scmp.eq.s32.totalorder %s47, 0
      %s50 = sadd.s32 %s49, 1
      %s51 = scalar_select %p48, %s49, %s50
      %p54 = pneg %p48
      %p55 = scmp.eq.s32.totalorder %s13, 1
      %p56 = por %p54, %p55
      %p57 = scmp.ne.s32.totalorder %s49, %s52
      %p58 = scmp.eq.s32.totalorder %s13, 0
      %p59 = por %p57, %p58
      %p60 = scmp.ne.s32.totalorder %s49, %s52
      %p61 = scmp.eq.s32.totalorder %s18, 1
      %p62 = por %p60, %p61
      %p63 = scmp.ne.s32.totalorder %s52, %s53
      %p64 = scmp.eq.s32.totalorder %s18, 0
      %p65 = por %p63, %p64
      %p66 = scmp.ne.s32.totalorder %s52, %s53
      %p67 = scmp.eq.s32.totalorder %s19, 1
      %p68 = por %p66, %p67
      %p70 = scmp.ne.s32.totalorder %s53, %s69
      %p71 = scmp.eq.s32.totalorder %s19, 0
      %p72 = por %p70, %p71
      %s74 = sadd.s32 %s73, 1
      %p77 = scmp.eq.s32.totalorder %s13, 1
      %p78 = scmp.ne.s32.totalorder %s73, %s75
      %p79 = scmp.eq.s32.totalorder %s13, 0
      %p80 = por %p78, %p79
      %p81 = scmp.ne.s32.totalorder %s73, %s75
      %p82 = scmp.eq.s32.totalorder %s18, 1
      %p83 = por %p81, %p82
      %p84 = scmp.ne.s32.totalorder %s75, %s76
      %p85 = scmp.eq.s32.totalorder %s18, 0
      %p86 = por %p84, %p85
      %p87 = scmp.ne.s32.totalorder %s75, %s76
      %p88 = scmp.eq.s32.totalorder %s19, 1
      %p89 = por %p87, %p88
      %p91 = scmp.ne.s32.totalorder %s76, %s90
      %p92 = scmp.eq.s32.totalorder %s19, 0
      %p93 = por %p91, %p92
      %s94 = ssub.s32 %s13, %s20
      %p95 = scmp.eq.s32.totalorder %s94, 0
      %s97 = sadd.s32 %s96, 1
      %s98 = scalar_select %p95, %s96, %s97
      %p101 = pneg %p95
      %p102 = scmp.eq.s32.totalorder %s13, 1
      %p103 = por %p101, %p102
      %p104 = scmp.ne.s32.totalorder %s96, %s99
      %p105 = scmp.eq.s32.totalorder %s13, 0
      %p106 = por %p104, %p105
      %p107 = scmp.ne.s32.totalorder %s96, %s99
      %p108 = scmp.eq.s32.totalorder %s18, 1
      %p109 = por %p107, %p108
      %p110 = scmp.ne.s32.totalorder %s99, %s100
      %p111 = scmp.eq.s32.totalorder %s18, 0
      %p112 = por %p110, %p111
      %p113 = scmp.ne.s32.totalorder %s99, %s100
      %p114 = scmp.eq.s32.totalorder %s19, 1
      %p115 = por %p113, %p114
      %p117 = scmp.ne.s32.totalorder %s100, %s116
      %p118 = scmp.eq.s32.totalorder %s19, 0
      %p119 = por %p117, %p118
      %p120 = scmp.le.s32.totalorder 1, %s13
      %p121 = scmp.lt.s32.totalorder %s13, 3
      %p122 = pnand %p120, %p121
      %p123 = pneg %p122
      // Predicated region
      $region9: #{tpu_custom_call.1} parent=5 // pred_check
        _
      $region10: #{tpu_custom_call.1} parent=5 // pred_check_branch
        %125 = sbr.rel (%p122) target = $region12
      $region11: #{tpu_custom_call.1} parent=5 // pred_region
        %s126 = ssub.s32 %s13, 1
        // Predicated region
        $region13: #{tpu_custom_call.1} parent=11 // pred_check
          %p127 = pneg %p86
        $region14: #{tpu_custom_call.1} parent=11 // pred_check_branch
          %129 = sbr.rel (%p127) target = $region16
        $region15: #{tpu_custom_call.1} parent=11 // pred_region
          %s131 = ssub.s32 1536, 1536
          %132 = vsyncadd [#allocation3], %s131
          %s133 = sshll.u32 [#allocation2], 4
          %s134 = int_to_ptr.vmem [resolvable:$true] %s133
          %139 = dma.hbm_to_vmem [thread:$0]  %s2, 1536, %s134, [#allocation3], 128, 128, 8
        $region16: #{tpu_custom_call.1} parent=11 // pred_fallthru
          _
      $region12: #{tpu_custom_call.1} parent=5 // pred_fallthru
        _
      %p140 = scmp.lt.s32.totalorder %s13, 2
      // Predicated region
      $region17: #{tpu_custom_call.1} parent=5 // pred_check
        %p141 = pneg %p140
      $region18: #{tpu_custom_call.1} parent=5 // pred_check_branch
        %143 = sbr.rel (%p141) target = $region20
      $region19: #{tpu_custom_call.1} parent=5 // pred_region
        // Predicated region
        $region21: #{tpu_custom_call.1} parent=19 // pred_check
          %p144 = pneg %p33
        $region22: #{tpu_custom_call.1} parent=19 // pred_check_branch
          %146 = sbr.rel (%p144) target = $region24
        $region23: #{tpu_custom_call.1} parent=19 // pred_region
          %p147 = scmp.lt.s32.totalorder %s13, 1
          %s148 = scalar_select %p147, %s13, 1
          %s149 = smul.addr %s148, 8
          %s150 = scalar_lea.vmem %s0, %s149
        $region24: #{tpu_custom_call.1} parent=19 // pred_fallthru
          _
        // Predicated region
        $region25: #{tpu_custom_call.1} parent=19 // pred_check
          %p151 = pneg %p59
        $region26: #{tpu_custom_call.1} parent=19 // pred_check_branch
          %153 = sbr.rel (%p151) target = $region28
        $region27: #{tpu_custom_call.1} parent=19 // pred_region
          %p154 = scmp.lt.s32.totalorder %s13, 1
          %s155 = scalar_select %p154, %s13, 1
          %s156 = smul.addr %s155, 8
          %s157 = scalar_lea.vmem %s1, %s156
        $region28: #{tpu_custom_call.1} parent=19 // pred_fallthru
          _
      $region20: #{tpu_custom_call.1} parent=5 // pred_fallthru
        _
      %p158 = scmp.le.s32.totalorder 1, %s13
      %p159 = scmp.lt.s32.totalorder %s13, 3
      %p160 = pnand %p158, %p159
      %p161 = pneg %p160
      // Predicated region
      $region29: #{tpu_custom_call.1} parent=5 // pred_check
        _
      $region30: #{tpu_custom_call.1} parent=5 // pred_check_branch
        %163 = sbr.rel (%p160) target = $region32
      $region31: #{tpu_custom_call.1} parent=5 // pred_region
        %s164 = ssub.s32 %s13, 1
        // Predicated region
        $region33: #{tpu_custom_call.1} parent=31 // pred_check
          %p165 = pneg %p86
        $region34: #{tpu_custom_call.1} parent=31 // pred_check_branch
          %167 = sbr.rel (%p165) target = $region36
        $region35: #{tpu_custom_call.1} parent=31 // pred_region
          %168 = dma.done [#allocation3], 1536
        $region36: #{tpu_custom_call.1} parent=31 // pred_fallthru
          _
        %p169 = scmp.lt.s32.totalorder %s18, 1
        %s170 = scalar_select %p169, %s18, 1
        %s171 = smul.addr %s170, 8
        %s172 = scalar_lea.vmem %s0, %s171
        %p173 = pneg %p39
        %p174 = pneg %p36
        %p175 = scmp.lt.s32.totalorder %s18, 1
        %s176 = scalar_select %p175, %s18, 1
        %s177 = smul.addr %s176, 8
        %s178 = scalar_lea.vmem %s1, %s177
        %p179 = pneg %p65
        %p180 = pneg %p62
        %p181 = pneg %p86
        %p182 = pneg %p83
        %p183 = pneg %p112
        %p184 = pneg %p109
        %s185 = sand.u32 %s99, 1
        %s186 = scalar_lea.sflag [#allocation4], %s185
        %s187 = sand.u32 %s99, 1
        %s188 = smul.addr %s187, 8
        %s189 = scalar_lea.vmem [#allocation5], %s188
        %p190 = scmp.lt.s32.totalorder %s18, 1
        %s191 = scalar_select %p190, %s18, 1
        %s192 = smul.addr %s191, 8
        %s193 = scalar_lea.vmem %s0, %s192
        %p194 = scmp.lt.s32.totalorder %s18, 1
        %s195 = scalar_select %p194, %s18, 1
        %s196 = smul.addr %s195, 8
        %s197 = scalar_lea.vmem %s1, %s196
        %v198 = vld [vmem:[%s193] sm:$0xff]
        %v199 = vlaneseq
        %v200 = vand.u32 %v199, 127
        %201 = vset.pattern.permute.xlu0 0
        %202 = vperm.xlu0 %201, %v198
        %v203 = vpop.permute.xlu0 %202
        %vm204 = vcmp.eq.s32.totalorder %v200, %v203
        %v205 = vsel %vm204, 1, 0
        %v206 = vcvt.s32.f32 %v205
        %v207 = vld [vmem:[#allocation2] sm:$0xff]
        %v208 = vld [vmem:[#allocation2 + $0x8] sm:$0xff]
        %v209 = vld [vmem:[#allocation2 + $0x10] sm:$0xff]
        %v210 = vld [vmem:[#allocation2 + $0x18] sm:$0xff]
        %v211 = vld [vmem:[#allocation2 + $0x20] sm:$0xff]
        %v212 = vld [vmem:[#allocation2 + $0x28] sm:$0xff]
        %v213 = vld [vmem:[#allocation2 + $0x30] sm:$0xff]
        %v214 = vld [vmem:[#allocation2 + $0x38] sm:$0xff]
        %v215 = vld [vmem:[#allocation2 + $0x40] sm:$0xff]
        %v216 = vld [vmem:[#allocation2 + $0x48] sm:$0xff]
        %v217 = vld [vmem:[#allocation2 + $0x50] sm:$0xff]
        %v218 = vld [vmem:[#allocation2 + $0x58] sm:$0xff]
        %vm219 = vcmask 785408
        %v221 = vsel %vm219, %v206, 0
        %223 = vmatprep.subr.mxu0 0.0
        %v224 = vand.u32 %v207, 4294901760
        %225 = vmatpush1.msra.mxu0 %v224
        %226 = vmatprep.subr.mxu0 0.0
        %v227 = vand.u32 %v208, 4294901760
        %228 = vmatpush1.msra.mxu0 %v227
        %229 = vmatprep.subr.mxu0 0.0
        %v230 = vand.u32 %v209, 4294901760
        %231 = vmatpush1.msra.mxu0 %v230
        %232 = vmatprep.subr.mxu0 0.0
        %v233 = vand.u32 %v210, 4294901760
        %234 = vmatpush1.msra.mxu0 %v233
        %235 = vmatprep.subr.mxu0 0.0
        %v236 = vand.u32 %v211, 4294901760
        %237 = vmatpush1.msra.mxu0 %v236
        %238 = vmatprep.subr.mxu0 0.0
        %v239 = vand.u32 %v212, 4294901760
        %240 = vmatpush1.msra.mxu0 %v239
        %241 = vmatprep.subr.mxu0 0.0
        %v242 = vand.u32 %v213, 4294901760
        %243 = vmatpush1.msra.mxu0 %v242
        %244 = vmatprep.subr.mxu0 0.0
        %v245 = vand.u32 %v214, 4294901760
        %246 = vmatpush1.msra.mxu0 %v245
        %247 = vmatprep.subr.mxu0 0.0
        %v248 = vand.u32 %v215, 4294901760
        %249 = vmatpush1.msra.mxu0 %v248
        %250 = vmatprep.subr.mxu0 0.0
        %v251 = vand.u32 %v216, 4294901760
        %252 = vmatpush1.msra.mxu0 %v251
        %253 = vmatprep.subr.mxu0 0.0
        %v254 = vand.u32 %v217, 4294901760
        %255 = vmatpush1.msra.mxu0 %v254
        %256 = vmatprep.subr.mxu0 0.0
        %v257 = vand.u32 %v218, 4294901760
        %258 = vmatpush1.msra.mxu0 %v257
        %259 = vmatprep.subr.mxu0 0.0
        %260 = vmatpush1.msra.mxu0 0.0
        %261 = vmatprep.subr.mxu0 0.0
        %262 = vmatpush1.msra.mxu0 0.0
        %263 = vmatprep.subr.mxu0 0.0
        %264 = vmatpush1.msra.mxu0 0.0
        %265 = vmatprep.subr.mxu0 0.0
        %266 = vmatpush1.msra.mxu0 0.0
        %267 = vmatprep.subr.mxu0 0.0
        %268 = vmatpush1.msra.mxu0 0.0
        %269 = vmatprep.subr.mxu0 0.0
        %270 = vmatpush1.msra.mxu0 0.0
        %271 = vmatprep.subr.mxu0 0.0
        %272 = vmatpush1.msra.mxu0 0.0
        %273 = vmatprep.subr.mxu0 0.0
        %274 = vmatpush1.msra.mxu0 0.0
        %275 = vmatprep.subr.mxu0 0.0
        %276 = vmatpush1.msra.mxu0 0.0
        %277 = vmatprep.subr.mxu0 0.0
        %278 = vmatpush1.msra.mxu0 0.0
        %279 = vmatprep.subr.mxu0 0.0
        %280 = vmatpush1.msra.mxu0 0.0
        %281 = vmatprep.subr.mxu0 0.0
        %282 = vmatpush1.msra.mxu0 0.0
        %283 = vmatprep.subr.mxu0 0.0
        %284 = vmatpush1.msra.mxu0 0.0
        %285 = vmatprep.subr.mxu0 0.0
        %286 = vmatpush1.msra.mxu0 0.0
        %287 = vmatprep.subr.mxu0 0.0
        %288 = vmatpush1.msra.mxu0 0.0
        %289 = vmatprep.subr.mxu0 0.0
        %290 = vmatpush1.msra.mxu0 0.0
        %291 = vmatprep.subr.mxu0 0.0
        %292 = vmatpush1.msra.mxu0 0.0
        %293 = vmatprep.subr.mxu0 0.0
        %294 = vmatpush1.msra.mxu0 0.0
        %295 = vmatprep.subr.mxu0 0.0
        %296 = vmatpush1.msra.mxu0 0.0
        %297 = vmatprep.subr.mxu0 0.0
        %298 = vmatpush1.msra.mxu0 0.0
        %299 = vmatprep.mubr.f32.mxu0 0.0
        %v300 = vand.u32 %v221, 4294901760
        %v301 = vsub.f32 %v221, %v300
        %v302 = vand.u32 %v301, 4294901760
        %v303 = vsub.f32 %v301, %v302
        %v304 = vand.u32 %v303, 4294901760
        %305 = vmatmul.mubr.f32.gmra.mrb[0].mxu0 %v304
        %v306 = vpop.f32.mrb[0].mxu0
        %v307 = vadd.f32 0.0, %v306
        %v308 = vpop.f32.mrb[0].mxu0
        %309 = vdwg.mxu0
        %310 = vmatprep.subr.mxu0 0.0
        %v311 = vand.u32 %v207, 4294901760
        %v312 = vsub.f32 %v207, %v311
        %v313 = vand.u32 %v312, 4294901760
        %v314 = vsub.f32 %v312, %v313
        %v315 = vand.u32 %v314, 4294901760
        %316 = vmatpush1.msra.mxu0 %v315
        %317 = vmatprep.subr.mxu0 0.0
        %v318 = vand.u32 %v208, 4294901760
        %v319 = vsub.f32 %v208, %v318
        %v320 = vand.u32 %v319, 4294901760
        %v321 = vsub.f32 %v319, %v320
        %v322 = vand.u32 %v321, 4294901760
        %323 = vmatpush1.msra.mxu0 %v322
        %324 = vmatprep.subr.mxu0 0.0
        %v325 = vand.u32 %v209, 4294901760
        %v326 = vsub.f32 %v209, %v325
        %v327 = vand.u32 %v326, 4294901760
        %v328 = vsub.f32 %v326, %v327
        %v329 = vand.u32 %v328, 4294901760
        %330 = vmatpush1.msra.mxu0 %v329
        %331 = vmatprep.subr.mxu0 0.0
        %v332 = vand.u32 %v210, 4294901760
        %v333 = vsub.f32 %v210, %v332
        %v334 = vand.u32 %v333, 4294901760
        %v335 = vsub.f32 %v333, %v334
        %v336 = vand.u32 %v335, 4294901760
        %337 = vmatpush1.msra.mxu0 %v336
        %338 = vmatprep.subr.mxu0 0.0
        %v339 = vand.u32 %v211, 4294901760
        %v340 = vsub.f32 %v211, %v339
        %v341 = vand.u32 %v340, 4294901760
        %v342 = vsub.f32 %v340, %v341
        %v343 = vand.u32 %v342, 4294901760
        %344 = vmatpush1.msra.mxu0 %v343
        %345 = vmatprep.subr.mxu0 0.0
        %v346 = vand.u32 %v212, 4294901760
        %v347 = vsub.f32 %v212, %v346
        %v348 = vand.u32 %v347, 4294901760
        %v349 = vsub.f32 %v347, %v348
        %v350 = vand.u32 %v349, 4294901760
        %351 = vmatpush1.msra.mxu0 %v350
        %352 = vmatprep.subr.mxu0 0.0
        %v353 = vand.u32 %v213, 4294901760
        %v354 = vsub.f32 %v213, %v353
        %v355 = vand.u32 %v354, 4294901760
        %v356 = vsub.f32 %v354, %v355
        %v357 = vand.u32 %v356, 4294901760
        %358 = vmatpush1.msra.mxu0 %v357
        %359 = vmatprep.subr.mxu0 0.0
        %v360 = vand.u32 %v214, 4294901760
        %v361 = vsub.f32 %v214, %v360
        %v362 = vand.u32 %v361, 4294901760
        %v363 = vsub.f32 %v361, %v362
        %v364 = vand.u32 %v363, 4294901760
        %365 = vmatpush1.msra.mxu0 %v364
        %366 = vmatprep.subr.mxu0 0.0
        %v367 = vand.u32 %v215, 4294901760
        %v368 = vsub.f32 %v215, %v367
        %v369 = vand.u32 %v368, 4294901760
        %v370 = vsub.f32 %v368, %v369
        %v371 = vand.u32 %v370, 4294901760
        %372 = vmatpush1.msra.mxu0 %v371
        %373 = vmatprep.subr.mxu0 0.0
        %v374 = vand.u32 %v216, 4294901760
        %v375 = vsub.f32 %v216, %v374
        %v376 = vand.u32 %v375, 4294901760
        %v377 = vsub.f32 %v375, %v376
        %v378 = vand.u32 %v377, 4294901760
        %379 = vmatpush1.msra.mxu0 %v378
        %380 = vmatprep.subr.mxu0 0.0
        %v381 = vand.u32 %v217, 4294901760
        %v382 = vsub.f32 %v217, %v381
        %v383 = vand.u32 %v382, 4294901760
        %v384 = vsub.f32 %v382, %v383
        %v385 = vand.u32 %v384, 4294901760
        %386 = vmatpush1.msra.mxu0 %v385
        %387 = vmatprep.subr.mxu0 0.0
        %v388 = vand.u32 %v218, 4294901760
        %v389 = vsub.f32 %v218, %v388
        %v390 = vand.u32 %v389, 4294901760
        %v391 = vsub.f32 %v389, %v390
        %v392 = vand.u32 %v391, 4294901760
        %393 = vmatpush1.msra.mxu0 %v392
        %394 = vmatprep.subr.mxu0 0.0
        %395 = vmatpush1.msra.mxu0 0.0
        %396 = vmatprep.subr.mxu0 0.0
        %397 = vmatpush1.msra.mxu0 0.0
        %398 = vmatprep.subr.mxu0 0.0
        %399 = vmatpush1.msra.mxu0 0.0
        %400 = vmatprep.subr.mxu0 0.0
        %401 = vmatpush1.msra.mxu0 0.0
        %402 = vmatprep.subr.mxu0 0.0
        %403 = vmatpush1.msra.mxu0 0.0
        %404 = vmatprep.subr.mxu0 0.0
        %405 = vmatpush1.msra.mxu0 0.0
        %406 = vmatprep.subr.mxu0 0.0
        %407 = vmatpush1.msra.mxu0 0.0
        %408 = vmatprep.subr.mxu0 0.0
        %409 = vmatpush1.msra.mxu0 0.0
        %410 = vmatprep.subr.mxu0 0.0
        %411 = vmatpush1.msra.mxu0 0.0
        %412 = vmatprep.subr.mxu0 0.0
        %413 = vmatpush1.msra.mxu0 0.0
        %414 = vmatprep.subr.mxu0 0.0
        %415 = vmatpush1.msra.mxu0 0.0
        %416 = vmatprep.subr.mxu0 0.0
        %417 = vmatpush1.msra.mxu0 0.0
        %418 = vmatprep.subr.mxu0 0.0
        %419 = vmatpush1.msra.mxu0 0.0
        %420 = vmatprep.subr.mxu0 0.0
        %421 = vmatpush1.msra.mxu0 0.0
        %422 = vmatprep.subr.mxu0 0.0
        %423 = vmatpush1.msra.mxu0 0.0
        %424 = vmatprep.subr.mxu0 0.0
        %425 = vmatpush1.msra.mxu0 0.0
        %426 = vmatprep.subr.mxu0 0.0
        %427 = vmatpush1.msra.mxu0 0.0
        %428 = vmatprep.subr.mxu0 0.0
        %429 = vmatpush1.msra.mxu0 0.0
        %430 = vmatprep.subr.mxu0 0.0
        %431 = vmatpush1.msra.mxu0 0.0
        %432 = vmatprep.subr.mxu0 0.0
        %433 = vmatpush1.msra.mxu0 0.0
        %434 = vmatprep.mubr.f32.mxu0 0.0
        %v435 = vand.u32 %v221, 4294901760
        %436 = vmatmul.mubr.f32.gmra.mrb[0].mxu0 %v435
        %v437 = vpop.f32.mrb[0].mxu0
        %v438 = vadd.f32 %v307, %v437
        %v439 = vpop.f32.mrb[0].mxu0
        %440 = vdwg.mxu0
        %441 = vmatprep.subr.mxu0 0.0
        %v442 = vand.u32 %v207, 4294901760
        %v443 = vsub.f32 %v207, %v442
        %444 = vmatpush1.msra.mxu0 %v443
        %445 = vmatprep.subr.mxu0 0.0
        %v446 = vand.u32 %v208, 4294901760
        %v447 = vsub.f32 %v208, %v446
        %448 = vmatpush1.msra.mxu0 %v447
        %449 = vmatprep.subr.mxu0 0.0
        %v450 = vand.u32 %v209, 4294901760
        %v451 = vsub.f32 %v209, %v450
        %452 = vmatpush1.msra.mxu0 %v451
        %453 = vmatprep.subr.mxu0 0.0
        %v454 = vand.u32 %v210, 4294901760
        %v455 = vsub.f32 %v210, %v454
        %456 = vmatpush1.msra.mxu0 %v455
        %457 = vmatprep.subr.mxu0 0.0
        %v458 = vand.u32 %v211, 4294901760
        %v459 = vsub.f32 %v211, %v458
        %460 = vmatpush1.msra.mxu0 %v459
        %461 = vmatprep.subr.mxu0 0.0
        %v462 = vand.u32 %v212, 4294901760
        %v463 = vsub.f32 %v212, %v462
        %464 = vmatpush1.msra.mxu0 %v463
        %465 = vmatprep.subr.mxu0 0.0
        %v466 = vand.u32 %v213, 4294901760
        %v467 = vsub.f32 %v213, %v466
        %468 = vmatpush1.msra.mxu0 %v467
        %469 = vmatprep.subr.mxu0 0.0
        %v470 = vand.u32 %v214, 4294901760
        %v471 = vsub.f32 %v214, %v470
        %472 = vmatpush1.msra.mxu0 %v471
        %473 = vmatprep.subr.mxu0 0.0
        %v474 = vand.u32 %v215, 4294901760
        %v475 = vsub.f32 %v215, %v474
        %476 = vmatpush1.msra.mxu0 %v475
        %477 = vmatprep.subr.mxu0 0.0
        %v478 = vand.u32 %v216, 4294901760
        %v479 = vsub.f32 %v216, %v478
        %480 = vmatpush1.msra.mxu0 %v479
        %481 = vmatprep.subr.mxu0 0.0
        %v482 = vand.u32 %v217, 4294901760
        %v483 = vsub.f32 %v217, %v482
        %484 = vmatpush1.msra.mxu0 %v483
        %485 = vmatprep.subr.mxu0 0.0
        %v486 = vand.u32 %v218, 4294901760
        %v487 = vsub.f32 %v218, %v486
        %488 = vmatpush1.msra.mxu0 %v487
        %489 = vmatprep.subr.mxu0 0.0
        %490 = vmatpush1.msra.mxu0 0.0
        %491 = vmatprep.subr.mxu0 0.0
        %492 = vmatpush1.msra.mxu0 0.0
        %493 = vmatprep.subr.mxu0 0.0
        %494 = vmatpush1.msra.mxu0 0.0
        %495 = vmatprep.subr.mxu0 0.0
        %496 = vmatpush1.msra.mxu0 0.0
        %497 = vmatprep.subr.mxu0 0.0
        %498 = vmatpush1.msra.mxu0 0.0
        %499 = vmatprep.subr.mxu0 0.0
        %500 = vmatpush1.msra.mxu0 0.0
        %501 = vmatprep.subr.mxu0 0.0
        %502 = vmatpush1.msra.mxu0 0.0
        %503 = vmatprep.subr.mxu0 0.0
        %504 = vmatpush1.msra.mxu0 0.0
        %505 = vmatprep.subr.mxu0 0.0
        %506 = vmatpush1.msra.mxu0 0.0
        %507 = vmatprep.subr.mxu0 0.0
        %508 = vmatpush1.msra.mxu0 0.0
        %509 = vmatprep.subr.mxu0 0.0
        %510 = vmatpush1.msra.mxu0 0.0
        %511 = vmatprep.subr.mxu0 0.0
        %512 = vmatpush1.msra.mxu0 0.0
        %513 = vmatprep.subr.mxu0 0.0
        %514 = vmatpush1.msra.mxu0 0.0
        %515 = vmatprep.subr.mxu0 0.0
        %516 = vmatpush1.msra.mxu0 0.0
        %517 = vmatprep.subr.mxu0 0.0
        %518 = vmatpush1.msra.mxu0 0.0
        %519 = vmatprep.subr.mxu0 0.0
        %520 = vmatpush1.msra.mxu0 0.0
        %521 = vmatprep.subr.mxu0 0.0
        %522 = vmatpush1.msra.mxu0 0.0
        %523 = vmatprep.subr.mxu0 0.0
        %524 = vmatpush1.msra.mxu0 0.0
        %525 = vmatprep.subr.mxu0 0.0
        %526 = vmatpush1.msra.mxu0 0.0
        %527 = vmatprep.subr.mxu0 0.0
        %528 = vmatpush1.msra.mxu0 0.0
        %529 = vmatprep.mubr.f32.mxu0 0.0
        %v530 = vand.u32 %v221, 4294901760
        %v531 = vsub.f32 %v221, %v530
        %532 = vmatmul.mubr.f32.gmra.mrb[0].mxu0 %v531
        %v533 = vpop.f32.mrb[0].mxu0
        %v534 = vadd.f32 %v438, %v533
        %v535 = vpop.f32.mrb[0].mxu0
        %536 = vdwg.mxu0
        %537 = vmatprep.subr.mxu0 0.0
        %v538 = vand.u32 %v207, 4294901760
        %539 = vmatpush1.msra.mxu0 %v538
        %540 = vmatprep.subr.mxu0 0.0
        %v541 = vand.u32 %v208, 4294901760
        %542 = vmatpush1.msra.mxu0 %v541
        %543 = vmatprep.subr.mxu0 0.0
        %v544 = vand.u32 %v209, 4294901760
        %545 = vmatpush1.msra.mxu0 %v544
        %546 = vmatprep.subr.mxu0 0.0
        %v547 = vand.u32 %v210, 4294901760
        %548 = vmatpush1.msra.mxu0 %v547
        %549 = vmatprep.subr.mxu0 0.0
        %v550 = vand.u32 %v211, 4294901760
        %551 = vmatpush1.msra.mxu0 %v550
        %552 = vmatprep.subr.mxu0 0.0
        %v553 = vand.u32 %v212, 4294901760
        %554 = vmatpush1.msra.mxu0 %v553
        %555 = vmatprep.subr.mxu0 0.0
        %v556 = vand.u32 %v213, 4294901760
        %557 = vmatpush1.msra.mxu0 %v556
        %558 = vmatprep.subr.mxu0 0.0
        %v559 = vand.u32 %v214, 4294901760
        %560 = vmatpush1.msra.mxu0 %v559
        %561 = vmatprep.subr.mxu0 0.0
        %v562 = vand.u32 %v215, 4294901760
        %563 = vmatpush1.msra.mxu0 %v562
        %564 = vmatprep.subr.mxu0 0.0
        %v565 = vand.u32 %v216, 4294901760
        %566 = vmatpush1.msra.mxu0 %v565
        %567 = vmatprep.subr.mxu0 0.0
        %v568 = vand.u32 %v217, 4294901760
        %569 = vmatpush1.msra.mxu0 %v568
        %570 = vmatprep.subr.mxu0 0.0
        %v571 = vand.u32 %v218, 4294901760
        %572 = vmatpush1.msra.mxu0 %v571
        %573 = vmatprep.subr.mxu0 0.0
        %574 = vmatpush1.msra.mxu0 0.0
        %575 = vmatprep.subr.mxu0 0.0
        %576 = vmatpush1.msra.mxu0 0.0
        %577 = vmatprep.subr.mxu0 0.0
        %578 = vmatpush1.msra.mxu0 0.0
        %579 = vmatprep.subr.mxu0 0.0
        %580 = vmatpush1.msra.mxu0 0.0
        %581 = vmatprep.subr.mxu0 0.0
        %582 = vmatpush1.msra.mxu0 0.0
        %583 = vmatprep.subr.mxu0 0.0
        %584 = vmatpush1.msra.mxu0 0.0
        %585 = vmatprep.subr.mxu0 0.0
        %586 = vmatpush1.msra.mxu0 0.0
        %587 = vmatprep.subr.mxu0 0.0
        %588 = vmatpush1.msra.mxu0 0.0
        %589 = vmatprep.subr.mxu0 0.0
        %590 = vmatpush1.msra.mxu0 0.0
        %591 = vmatprep.subr.mxu0 0.0
        %592 = vmatpush1.msra.mxu0 0.0
        %593 = vmatprep.subr.mxu0 0.0
        %594 = vmatpush1.msra.mxu0 0.0
        %595 = vmatprep.subr.mxu0 0.0
        %596 = vmatpush1.msra.mxu0 0.0
        %597 = vmatprep.subr.mxu0 0.0
        %598 = vmatpush1.msra.mxu0 0.0
        %599 = vmatprep.subr.mxu0 0.0
        %600 = vmatpush1.msra.mxu0 0.0
        %601 = vmatprep.subr.mxu0 0.0
        %602 = vmatpush1.msra.mxu0 0.0
        %603 = vmatprep.subr.mxu0 0.0
        %604 = vmatpush1.msra.mxu0 0.0
        %605 = vmatprep.subr.mxu0 0.0
        %606 = vmatpush1.msra.mxu0 0.0
        %607 = vmatprep.subr.mxu0 0.0
        %608 = vmatpush1.msra.mxu0 0.0
        %609 = vmatprep.subr.mxu0 0.0
        %610 = vmatpush1.msra.mxu0 0.0
        %611 = vmatprep.subr.mxu0 0.0
        %612 = vmatpush1.msra.mxu0 0.0
        %613 = vmatprep.mubr.f32.mxu0 0.0
        %v614 = vand.u32 %v221, 4294901760
        %v615 = vsub.f32 %v221, %v614
        %v616 = vand.u32 %v615, 4294901760
        %617 = vmatmul.mubr.f32.gmra.mrb[0].mxu0 %v616
        %v618 = vpop.f32.mrb[0].mxu0
        %v619 = vadd.f32 %v534, %v618
        %v620 = vpop.f32.mrb[0].mxu0
        %621 = vdwg.mxu0
        %622 = vmatprep.subr.mxu0 0.0
        %v623 = vand.u32 %v207, 4294901760
        %v624 = vsub.f32 %v207, %v623
        %v625 = vand.u32 %v624, 4294901760
        %626 = vmatpush1.msra.mxu0 %v625
        %627 = vmatprep.subr.mxu0 0.0
        %v628 = vand.u32 %v208, 4294901760
        %v629 = vsub.f32 %v208, %v628
        %v630 = vand.u32 %v629, 4294901760
        %631 = vmatpush1.msra.mxu0 %v630
        %632 = vmatprep.subr.mxu0 0.0
        %v633 = vand.u32 %v209, 4294901760
        %v634 = vsub.f32 %v209, %v633
        %v635 = vand.u32 %v634, 4294901760
        %636 = vmatpush1.msra.mxu0 %v635
        %637 = vmatprep.subr.mxu0 0.0
        %v638 = vand.u32 %v210, 4294901760
        %v639 = vsub.f32 %v210, %v638
        %v640 = vand.u32 %v639, 4294901760
        %641 = vmatpush1.msra.mxu0 %v640
        %642 = vmatprep.subr.mxu0 0.0
        %v643 = vand.u32 %v211, 4294901760
        %v644 = vsub.f32 %v211, %v643
        %v645 = vand.u32 %v644, 4294901760
        %646 = vmatpush1.msra.mxu0 %v645
        %647 = vmatprep.subr.mxu0 0.0
        %v648 = vand.u32 %v212, 4294901760
        %v649 = vsub.f32 %v212, %v648
        %v650 = vand.u32 %v649, 4294901760
        %651 = vmatpush1.msra.mxu0 %v650
        %652 = vmatprep.subr.mxu0 0.0
        %v653 = vand.u32 %v213, 4294901760
        %v654 = vsub.f32 %v213, %v653
        %v655 = vand.u32 %v654, 4294901760
        %656 = vmatpush1.msra.mxu0 %v655
        %657 = vmatprep.subr.mxu0 0.0
        %v658 = vand.u32 %v214, 4294901760
        %v659 = vsub.f32 %v214, %v658
        %v660 = vand.u32 %v659, 4294901760
        %661 = vmatpush1.msra.mxu0 %v660
        %662 = vmatprep.subr.mxu0 0.0
        %v663 = vand.u32 %v215, 4294901760
        %v664 = vsub.f32 %v215, %v663
        %v665 = vand.u32 %v664, 4294901760
        %666 = vmatpush1.msra.mxu0 %v665
        %667 = vmatprep.subr.mxu0 0.0
        %v668 = vand.u32 %v216, 4294901760
        %v669 = vsub.f32 %v216, %v668
        %v670 = vand.u32 %v669, 4294901760
        %671 = vmatpush1.msra.mxu0 %v670
        %672 = vmatprep.subr.mxu0 0.0
        %v673 = vand.u32 %v217, 4294901760
        %v674 = vsub.f32 %v217, %v673
        %v675 = vand.u32 %v674, 4294901760
        %676 = vmatpush1.msra.mxu0 %v675
        %677 = vmatprep.subr.mxu0 0.0
        %v678 = vand.u32 %v218, 4294901760
        %v679 = vsub.f32 %v218, %v678
        %v680 = vand.u32 %v679, 4294901760
        %681 = vmatpush1.msra.mxu0 %v680
        %682 = vmatprep.subr.mxu0 0.0
        %683 = vmatpush1.msra.mxu0 0.0
        %684 = vmatprep.subr.mxu0 0.0
        %685 = vmatpush1.msra.mxu0 0.0
        %686 = vmatprep.subr.mxu0 0.0
        %687 = vmatpush1.msra.mxu0 0.0
        %688 = vmatprep.subr.mxu0 0.0
        %689 = vmatpush1.msra.mxu0 0.0
        %690 = vmatprep.subr.mxu0 0.0
        %691 = vmatpush1.msra.mxu0 0.0
        %692 = vmatprep.subr.mxu0 0.0
        %693 = vmatpush1.msra.mxu0 0.0
        %694 = vmatprep.subr.mxu0 0.0
        %695 = vmatpush1.msra.mxu0 0.0
        %696 = vmatprep.subr.mxu0 0.0
        %697 = vmatpush1.msra.mxu0 0.0
        %698 = vmatprep.subr.mxu0 0.0
        %699 = vmatpush1.msra.mxu0 0.0
        %700 = vmatprep.subr.mxu0 0.0
        %701 = vmatpush1.msra.mxu0 0.0
        %702 = vmatprep.subr.mxu0 0.0
        %703 = vmatpush1.msra.mxu0 0.0
        %704 = vmatprep.subr.mxu0 0.0
        %705 = vmatpush1.msra.mxu0 0.0
        %706 = vmatprep.subr.mxu0 0.0
        %707 = vmatpush1.msra.mxu0 0.0
        %708 = vmatprep.subr.mxu0 0.0
        %709 = vmatpush1.msra.mxu0 0.0
        %710 = vmatprep.subr.mxu0 0.0
        %711 = vmatpush1.msra.mxu0 0.0
        %712 = vmatprep.subr.mxu0 0.0
        %713 = vmatpush1.msra.mxu0 0.0
        %714 = vmatprep.subr.mxu0 0.0
        %715 = vmatpush1.msra.mxu0 0.0
        %716 = vmatprep.subr.mxu0 0.0
        %717 = vmatpush1.msra.mxu0 0.0
        %718 = vmatprep.subr.mxu0 0.0
        %719 = vmatpush1.msra.mxu0 0.0
        %720 = vmatprep.subr.mxu0 0.0
        %721 = vmatpush1.msra.mxu0 0.0
        %722 = vmatprep.mubr.f32.mxu0 0.0
        %v723 = vand.u32 %v221, 4294901760
        %724 = vmatmul.mubr.f32.gmra.mrb[0].mxu0 %v723
        %v725 = vpop.f32.mrb[0].mxu0
        %v726 = vadd.f32 %v619, %v725
        %v727 = vpop.f32.mrb[0].mxu0
        %728 = vdwg.mxu0
        %729 = vmatprep.subr.mxu0 0.0
        %v730 = vand.u32 %v207, 4294901760
        %731 = vmatpush1.msra.mxu0 %v730
        %732 = vmatprep.subr.mxu0 0.0
        %v733 = vand.u32 %v208, 4294901760
        %734 = vmatpush1.msra.mxu0 %v733
        %735 = vmatprep.subr.mxu0 0.0
        %v736 = vand.u32 %v209, 4294901760
        %737 = vmatpush1.msra.mxu0 %v736
        %738 = vmatprep.subr.mxu0 0.0
        %v739 = vand.u32 %v210, 4294901760
        %740 = vmatpush1.msra.mxu0 %v739
        %741 = vmatprep.subr.mxu0 0.0
        %v742 = vand.u32 %v211, 4294901760
        %743 = vmatpush1.msra.mxu0 %v742
        %744 = vmatprep.subr.mxu0 0.0
        %v745 = vand.u32 %v212, 4294901760
        %746 = vmatpush1.msra.mxu0 %v745
        %747 = vmatprep.subr.mxu0 0.0
        %v748 = vand.u32 %v213, 4294901760
        %749 = vmatpush1.msra.mxu0 %v748
        %750 = vmatprep.subr.mxu0 0.0
        %v751 = vand.u32 %v214, 4294901760
        %752 = vmatpush1.msra.mxu0 %v751
        %753 = vmatprep.subr.mxu0 0.0
        %v754 = vand.u32 %v215, 4294901760
        %755 = vmatpush1.msra.mxu0 %v754
        %756 = vmatprep.subr.mxu0 0.0
        %v757 = vand.u32 %v216, 4294901760
        %758 = vmatpush1.msra.mxu0 %v757
        %759 = vmatprep.subr.mxu0 0.0
        %v760 = vand.u32 %v217, 4294901760
        %761 = vmatpush1.msra.mxu0 %v760
        %762 = vmatprep.subr.mxu0 0.0
        %v763 = vand.u32 %v218, 4294901760
        %764 = vmatpush1.msra.mxu0 %v763
        %765 = vmatprep.subr.mxu0 0.0
        %766 = vmatpush1.msra.mxu0 0.0
        %767 = vmatprep.subr.mxu0 0.0
        %768 = vmatpush1.msra.mxu0 0.0
        %769 = vmatprep.subr.mxu0 0.0
        %770 = vmatpush1.msra.mxu0 0.0
        %771 = vmatprep.subr.mxu0 0.0
        %772 = vmatpush1.msra.mxu0 0.0
        %773 = vmatprep.subr.mxu0 0.0
        %774 = vmatpush1.msra.mxu0 0.0
        %775 = vmatprep.subr.mxu0 0.0
        %776 = vmatpush1.msra.mxu0 0.0
        %777 = vmatprep.subr.mxu0 0.0
        %778 = vmatpush1.msra.mxu0 0.0
        %779 = vmatprep.subr.mxu0 0.0
        %780 = vmatpush1.msra.mxu0 0.0
        %781 = vmatprep.subr.mxu0 0.0
        %782 = vmatpush1.msra.mxu0 0.0
        %783 = vmatprep.subr.mxu0 0.0
        %784 = vmatpush1.msra.mxu0 0.0
        %785 = vmatprep.subr.mxu0 0.0
        %786 = vmatpush1.msra.mxu0 0.0
        %787 = vmatprep.subr.mxu0 0.0
        %788 = vmatpush1.msra.mxu0 0.0
        %789 = vmatprep.subr.mxu0 0.0
        %790 = vmatpush1.msra.mxu0 0.0
        %791 = vmatprep.subr.mxu0 0.0
        %792 = vmatpush1.msra.mxu0 0.0
        %793 = vmatprep.subr.mxu0 0.0
        %794 = vmatpush1.msra.mxu0 0.0
        %795 = vmatprep.subr.mxu0 0.0
        %796 = vmatpush1.msra.mxu0 0.0
        %797 = vmatprep.subr.mxu0 0.0
        %798 = vmatpush1.msra.mxu0 0.0
        %799 = vmatprep.subr.mxu0 0.0
        %800 = vmatpush1.msra.mxu0 0.0
        %801 = vmatprep.subr.mxu0 0.0
        %802 = vmatpush1.msra.mxu0 0.0
        %803 = vmatprep.subr.mxu0 0.0
        %804 = vmatpush1.msra.mxu0 0.0
        %805 = vmatprep.mubr.f32.mxu0 0.0
        %v806 = vand.u32 %v221, 4294901760
        %807 = vmatmul.mubr.f32.gmra.mrb[0].mxu0 %v806
        %v808 = vpop.f32.mrb[0].mxu0
        %v809 = vadd.f32 %v726, %v808
        %v810 = vpop.f32.mrb[0].mxu0
        %811 = vdwg.mxu0
        %v812 = vld [vmem:[%s197] sm:$0xff]
        %v813 = vadd.f32 %v812, %v809
        %814 = vst [vmem:[%s189] sm:$0xff] %v813
        %s815 = sand.u32 %s99, 1
        %s816 = scalar_lea.sflag [#allocation4], %s815
        %s817 = sand.u32 %s99, 1
        %s818 = smul.addr %s817, 8
        %s819 = scalar_lea.vmem [#allocation5], %s818
        // Predicated region
        $region37: #{tpu_custom_call.1} parent=31 // pred_check
          %p820 = pneg %p109
        $region38: #{tpu_custom_call.1} parent=31 // pred_check_branch
          %822 = sbr.rel (%p820) target = $region40
        $region39: #{tpu_custom_call.1} parent=31 // pred_region
          %s824 = ssub.s32 128, 128
          %825 = vsyncadd %s816, %s824
          %s826 = smul.addr %s18, 128
          %s827 = scalar_lea.hbm %s3, %s826
          %s829 = sshll.u32 %s819, 4
          %s830 = int_to_ptr.vmem [resolvable:$true] %s829
          %832 = dma.vmem_to_hbm [thread:$0]  %s830, 128, %s827, %s816
        $region40: #{tpu_custom_call.1} parent=31 // pred_fallthru
          _
      $region32: #{tpu_custom_call.1} parent=5 // pred_fallthru
        _
      %p833 = scmp.le.s32.totalorder 2, %s13
      // Predicated region
      $region41: #{tpu_custom_call.1} parent=5 // pred_check
        %p834 = pneg %p833
      $region42: #{tpu_custom_call.1} parent=5 // pred_check_branch
        %836 = sbr.rel (%p834) target = $region44
      $region43: #{tpu_custom_call.1} parent=5 // pred_region
        %s837 = ssub.s32 %s13, 2
        // Predicated region
        $region45: #{tpu_custom_call.1} parent=43 // pred_check
          %p838 = pneg %p115
        $region46: #{tpu_custom_call.1} parent=43 // pred_check_branch
          %840 = sbr.rel (%p838) target = $region48
        $region47: #{tpu_custom_call.1} parent=43 // pred_region
          %s841 = sand.u32 %s100, 1
          %s842 = scalar_lea.sflag [#allocation4], %s841
          %s843 = sand.u32 %s100, 1
          %s844 = smul.addr %s843, 8
          %s845 = scalar_lea.vmem [#allocation5], %s844
          %846 = dma.done %s842, 128
        $region48: #{tpu_custom_call.1} parent=43 // pred_fallthru
          _
      $region44: #{tpu_custom_call.1} parent=5 // pred_fallthru
        _
    $region6: #{tpu_custom_call.1} parent=1 // loop_footer
      %s17 = sadd.s32 1, %s13
    $region7: #{tpu_custom_call.1} parent=1 // loop_footer_branch
      %12 = sbr.rel target = $region3
    $region8: #{tpu_custom_call.1} parent=1 // loop_exit
      _
    %847 = vsyncpa [#allocation3], 1
    %s848 = scalar_lea.sflag [#allocation3], 1
    %849 = vsyncpa %s848, 1
    %850 = vsyncpa [#allocation4], 1
    %s851 = scalar_lea.sflag [#allocation4], 1
    %852 = vsyncpa %s851, 1

</llo_original>
